<compile_context>
chip_gen: v7x
topology: tpu7x:2x2x1
jax: 0.10.0
libtpu: 0.0.40
codegen_flags: <defaults>
</compile_context>

<pallas_src>
import functools

import jax
import jax.numpy as jnp
from jax.experimental import pallas as pl
from jax.experimental.pallas import tpu as pltpu

NEG_SLOPE = 0.01  # nn.LeakyReLU default


def _leaky_relu(x):
    return jnp.where(x >= 0, x, NEG_SLOPE * x)


# ----------------------------------------------------------------------------
# Kernel: one batch element per grid step, packed-row layout (rows = H,
# lanes = W*C, channel fastest).
# ----------------------------------------------------------------------------
def _residual_block_kernel(*refs, H, W, Cout, has_skip):
    if has_skip:
        (x_ref, w1_ref, b1_ref, w2_ref, b2_ref,
         wsk_ref, bsk_ref, out_ref) = refs
    else:
        (x_ref, w1_ref, b1_ref, w2_ref, b2_ref, out_ref) = refs

    # x_ref   : (1, H+2, W*Cin)  H-padded packed input (W padding is folded
    #                            into the banded weights)
    # w1_ref  : (3, W*Cin, W*Cout) banded conv1 weights (one per kH tap)
    # w2_ref  : (3, W*Cout, W*Cout) banded conv2 weights
    # b*_ref  : (1, W*Cout)       biases tiled along W (lane-dense)
    # wsk_ref : (W*Cin, W*Cout)   block-diagonal 1x1 skip (only if has_skip)
    # out_ref : (1, H, W*Cout)
    x = x_ref[0]                                           # (H+2, W*Cin)

    # ---- conv1 (3x3, pad=1): 3 banded matmuls, lane-dense accumulator ----
    # NOTE: for large channel counts cast operands to bf16 here (keep
    # preferred_element_type=f32); at these widths the kernel is layout-bound.
    acc = jnp.dot(x[0:H, :], w1_ref[0], preferred_element_type=jnp.float32)
    acc += jnp.dot(x[1:H + 1, :], w1_ref[1], preferred_element_type=jnp.float32)
    acc += jnp.dot(x[2:H + 2, :], w1_ref[2], preferred_element_type=jnp.float32)
    acc = _leaky_relu(acc + b1_ref[...])

    # ---- conv2 (3x3, pad=1): H halo = two zero rows, built in-register ----
    zrow = jnp.zeros((1, W * Cout), jnp.float32)
    mid = jnp.concatenate([zrow, acc, zrow], axis=0)       # (H+2, W*Cout)
    acc2 = jnp.dot(mid[0:H, :], w2_ref[0], preferred_element_type=jnp.float32)
    acc2 += jnp.dot(mid[1:H + 1, :], w2_ref[1], preferred_element_type=jnp.float32)
    acc2 += jnp.dot(mid[2:H + 2, :], w2_ref[2], preferred_element_type=jnp.float32)
    acc2 = _leaky_relu(acc2 + b2_ref[...])

    # ---- skip connection ----
    if has_skip:
        skip = jnp.dot(x[1:H + 1, :], wsk_ref[...],
                       preferred_element_type=jnp.float32) + bsk_ref[...]
    else:
        # in_ch == out_ch -> skip is identity; packed layouts coincide.
        skip = x[1:H + 1, :]

    out_ref[0] = acc2 + skip


# ----------------------------------------------------------------------------
# Weight "Toeplitz-ization" (tiny, done once per call in plain JAX).
# ----------------------------------------------------------------------------
def _banded_conv3x3_weights(w, W):
    """w: (3, 3, Cin, Cout) HWIO -> (3, W*Cin, W*Cout).

    B[dy][xin*Cin + ci, xout*Cout + co] = w[dy, xin - xout + 1, ci, co]
    (zero elsewhere), which also bakes in the zero padding along W.
    """
    Cin, Cout = w.shape[2], w.shape[3]
    xin = jnp.arange(W)[:, None]
    xout = jnp.arange(W)[None, :]
    band = jnp.stack(
        [(xin == xout + dx - 1).astype(w.dtype) for dx in range(3)], axis=0)
    return jnp.einsum('ydio,dxz->yxizo', w, band).reshape(3, W * Cin, W * Cout)


def _blockdiag_conv1x1_weights(wsk, W):
    """wsk: (Cin, Cout) -> block-diagonal (W*Cin, W*Cout)."""
    Cin, Cout = wsk.shape
    eye = jnp.eye(W, dtype=wsk.dtype)
    return jnp.einsum('io,xz->xizo', wsk, eye).reshape(W * Cin, W * Cout)


# ----------------------------------------------------------------------------
# Public wrapper (NCHW in / NCHW out, like the PyTorch module).
# ----------------------------------------------------------------------------
@functools.partial(jax.jit, static_argnames=("in_ch", "out_ch"))
def residual_block(x_nchw, params, *, in_ch, out_ch):
    """x_nchw: (N, Cin, H, W) float32 -> (N, Cout, H, W) float32."""
    w1, b1, w2, b2, wsk, bsk = params
    N, Cin, H, W = x_nchw.shape
    assert Cin == in_ch
    WCi, WCo = W * in_ch, W * out_ch
    has_skip = in_ch != out_ch

    # NCHW -> packed rows (H, W*C), channel fastest; pad H by 1 (conv halo).
    # TODO(synk): in an NHWC-native model these glue ops disappear entirely.
    x = jnp.transpose(x_nchw, (0, 2, 3, 1)).astype(jnp.float32).reshape(N, H, WCi)
    x = jnp.pad(x, ((0, 0), (1, 1), (0, 0)))

    w1b = _banded_conv3x3_weights(w1.astype(jnp.float32), W)      # (3, WCi, WCo)
    w2b = _banded_conv3x3_weights(w2.astype(jnp.float32), W)      # (3, WCo, WCo)
    b1p = jnp.tile(b1.astype(jnp.float32), W).reshape(1, WCo)
    b2p = jnp.tile(b2.astype(jnp.float32), W).reshape(1, WCo)

    args = [x, w1b, b1p, w2b, b2p]
    in_specs = [
        pl.BlockSpec((1, H + 2, WCi), lambda n: (n, 0, 0)),   # per-image input
        pl.BlockSpec((3, WCi, WCo), lambda n: (0, 0, 0)),     # weights stay resident
        pl.BlockSpec((1, WCo), lambda n: (0, 0)),
        pl.BlockSpec((3, WCo, WCo), lambda n: (0, 0, 0)),
        pl.BlockSpec((1, WCo), lambda n: (0, 0)),
    ]
    if has_skip:
        wskb = _blockdiag_conv1x1_weights(wsk.astype(jnp.float32), W)  # (WCi, WCo)
        bskp = jnp.tile(bsk.astype(jnp.float32), W).reshape(1, WCo)
        args += [wskb, bskp]
        in_specs += [pl.BlockSpec((WCi, WCo), lambda n: (0, 0)),
                     pl.BlockSpec((1, WCo), lambda n: (0, 0))]

    kernel = functools.partial(_residual_block_kernel,
                               H=H, W=W, Cout=out_ch, has_skip=has_skip)

    # TODO(synk): for large H add a second grid axis over row tiles (1-row halo).
    out_packed = pl.pallas_call(
        kernel,
        out_shape=jax.ShapeDtypeStruct((N, H, WCo), jnp.float32),
        grid=(N,),                                    # batch-tiled, pipelined DMA
        in_specs=in_specs,
        out_specs=pl.BlockSpec((1, H, WCo), lambda n: (n, 0, 0)),
        compiler_params=pltpu.CompilerParams(
            dimension_semantics=("parallel",),        # v7x: 2 TCs split the batch
            vmem_limit_bytes=32 * 1024 * 1024),       # well under v7x's 64 MiB
    )(*args)

    # packed (N, H, W*Cout) -> NCHW
    return jnp.transpose(out_packed.reshape(N, H, W, out_ch), (0, 3, 1, 2))


# ----------------------------------------------------------------------------
# Synthetic params + pure-JAX reference for correctness checks.
# ----------------------------------------------------------------------------
def init_params(key, in_ch, out_ch):
    """Deterministic synthetic parameters ((kH, kW, Cin, Cout) / HWIO layout)."""
    k1, k2, k3, k4, k5, k6 = jax.random.split(key, 6)
    w1 = jax.random.normal(k1, (3, 3, in_ch, out_ch), jnp.float32) * 0.1
    b1 = jax.random.normal(k2, (out_ch,), jnp.float32) * 0.1
    w2 = jax.random.normal(k3, (3, 3, out_ch, out_ch), jnp.float32) * 0.1
    b2 = jax.random.normal(k4, (out_ch,), jnp.float32) * 0.1
    if in_ch != out_ch:
        wsk = jax.random.normal(k5, (in_ch, out_ch), jnp.float32) * 0.1
        bsk = jax.random.normal(k6, (out_ch,), jnp.float32) * 0.1
    else:
        # PyTorch skip=None -> identity (kernel never touches these).
        wsk = jnp.eye(in_ch, dtype=jnp.float32)
        bsk = jnp.zeros((out_ch,), jnp.float32)
    return (w1, b1, w2, b2, wsk, bsk)


def _reference(x_nchw, params):
    """Pure-JAX reference (XLA convs)."""
    w1, b1, w2, b2, wsk, bsk = params
    x = jnp.transpose(x_nchw, (0, 2, 3, 1))

    def conv(h, w, b, pad):
        y = jax.lax.conv_general_dilated(
            h, w, window_strides=(1, 1), padding=pad,
            dimension_numbers=("NHWC", "HWIO", "NHWC"),
            precision=jax.lax.Precision.HIGHEST)
        return y + b

    out = conv(x, w1, b1, "SAME")
    out = jnp.where(out >= 0, out, NEG_SLOPE * out)
    out = conv(out, w2, b2, "SAME")
    out = jnp.where(out >= 0, out, NEG_SLOPE * out)
    ident = conv(x, wsk[None, None], bsk, "VALID")
    return jnp.transpose(out + ident, (0, 3, 1, 2))


if __name__ == "__main__":
    key = jax.random.PRNGKey(0)
    kx, kp, kp2 = jax.random.split(key, 3)

    # Case 1: in_ch != out_ch (learned 1x1 skip conv).
    N, IN_CH, OUT_CH, H, W = 2, 4, 8, 16, 16
    x = jax.random.normal(kx, (N, IN_CH, H, W), jnp.float32)
    params = init_params(kp, IN_CH, OUT_CH)
    out = jax.block_until_ready(
        residual_block(x, params, in_ch=IN_CH, out_ch=OUT_CH))
    ref = _reference(x, params)
    assert out.shape == (N, OUT_CH, H, W)
    assert jnp.allclose(out, ref, atol=2e-4, rtol=2e-4), "mismatch (skip branch)"

    # Case 2: in_ch == out_ch (identity skip, no matmul).
    x2 = jax.random.normal(jax.random.fold_in(kx, 1), (N, OUT_CH, H, W),
                           jnp.float32)
    params2 = init_params(kp2, OUT_CH, OUT_CH)
    out2 = jax.block_until_ready(
        residual_block(x2, params2, in_ch=OUT_CH, out_ch=OUT_CH))
    ref2 = _reference(x2, params2)
    assert jnp.allclose(out2, ref2, atol=2e-4, rtol=2e-4), \
        "mismatch (identity branch)"

    print("KERNEL_OK")
</pallas_src>

<mosaic_0001>
module attributes {stable_mosaic.version = 11 : i64} {
  func.func @_residual_block_kernel(%arg0: i32, %arg1: memref<1x18x64xf32, #tpu.memory_space<vmem>>, %arg2: memref<3x64x128xf32, #tpu.memory_space<vmem>>, %arg3: memref<1x128xf32, #tpu.memory_space<vmem>>, %arg4: memref<3x128x128xf32, #tpu.memory_space<vmem>>, %arg5: memref<1x128xf32, #tpu.memory_space<vmem>>, %arg6: memref<64x128xf32, #tpu.memory_space<vmem>>, %arg7: memref<1x128xf32, #tpu.memory_space<vmem>>, %arg8: memref<1x16x128xf32, #tpu.memory_space<vmem>>) attributes {dimension_semantics = [#tpu.dimension_semantics<parallel>], iteration_bounds = array<i64: 2>, scalar_prefetch = 0 : i64, scratch_operands = 0 : i64, tpu.core_type = #tpu.core_type<tc>, window_params = [{transform_indices = @transform_0, window_bounds = array<i64: 1, 18, 64>}, {pipeline_mode = #tpu.pipeline_mode<synchronous>, transform_indices = @transform_1, window_bounds = array<i64: 3, 64, 128>}, {pipeline_mode = #tpu.pipeline_mode<synchronous>, transform_indices = @transform_2, window_bounds = array<i64: 1, 128>}, {pipeline_mode = #tpu.pipeline_mode<synchronous>, transform_indices = @transform_3, window_bounds = array<i64: 3, 128, 128>}, {pipeline_mode = #tpu.pipeline_mode<synchronous>, transform_indices = @transform_4, window_bounds = array<i64: 1, 128>}, {pipeline_mode = #tpu.pipeline_mode<synchronous>, transform_indices = @transform_5, window_bounds = array<i64: 64, 128>}, {pipeline_mode = #tpu.pipeline_mode<synchronous>, transform_indices = @transform_6, window_bounds = array<i64: 1, 128>}, {transform_indices = @transform_7, window_bounds = array<i64: 1, 16, 128>}]} {
    %c0 = arith.constant 0 : index
    %c0_0 = arith.constant 0 : index
    %c0_1 = arith.constant 0 : index
    %0 = vector.load %arg1[%c0, %c0_0, %c0_1] : memref<1x18x64xf32, #tpu.memory_space<vmem>>, vector<1x18x64xf32>
    %1 = vector.shape_cast %0 : vector<1x18x64xf32> to vector<18x64xf32>
    %2 = vector.extract_strided_slice %1 {offsets = [0, 0], sizes = [16, 64], strides = [1, 1]} : vector<18x64xf32> to vector<16x64xf32>
    %c0_2 = arith.constant 0 : index
    %c0_3 = arith.constant 0 : index
    %c0_4 = arith.constant 0 : index
    %3 = vector.load %arg2[%c0_2, %c0_3, %c0_4] : memref<3x64x128xf32, #tpu.memory_space<vmem>>, vector<1x64x128xf32>
    %4 = vector.shape_cast %3 : vector<1x64x128xf32> to vector<64x128xf32>
    %cst = arith.constant dense<0.000000e+00> : vector<16x128xf32>
    %5 = tpu.matmul %2, %4, %cst {dimension_numbers = #tpu.dot_dimension_numbers<[1], [0], [0], [1], [0, 0, 1, 1], [], []>} : vector<16x64xf32>, vector<64x128xf32>, vector<16x128xf32> -> vector<16x128xf32>
    %6 = vector.extract_strided_slice %1 {offsets = [1, 0], sizes = [16, 64], strides = [1, 1]} : vector<18x64xf32> to vector<16x64xf32>
    %c1 = arith.constant 1 : index
    %c0_5 = arith.constant 0 : index
    %c0_6 = arith.constant 0 : index
    %7 = vector.load %arg2[%c1, %c0_5, %c0_6] : memref<3x64x128xf32, #tpu.memory_space<vmem>>, vector<1x64x128xf32>
    %8 = vector.shape_cast %7 : vector<1x64x128xf32> to vector<64x128xf32>
    %cst_7 = arith.constant dense<0.000000e+00> : vector<16x128xf32>
    %9 = tpu.matmul %6, %8, %cst_7 {dimension_numbers = #tpu.dot_dimension_numbers<[1], [0], [0], [1], [0, 0, 1, 1], [], []>} : vector<16x64xf32>, vector<64x128xf32>, vector<16x128xf32> -> vector<16x128xf32>
    %10 = arith.addf %5, %9 : vector<16x128xf32>
    %11 = vector.extract_strided_slice %1 {offsets = [2, 0], sizes = [16, 64], strides = [1, 1]} : vector<18x64xf32> to vector<16x64xf32>
    %c2 = arith.constant 2 : index
    %c0_8 = arith.constant 0 : index
    %c0_9 = arith.constant 0 : index
    %12 = vector.load %arg2[%c2, %c0_8, %c0_9] : memref<3x64x128xf32, #tpu.memory_space<vmem>>, vector<1x64x128xf32>
    %13 = vector.shape_cast %12 : vector<1x64x128xf32> to vector<64x128xf32>
    %cst_10 = arith.constant dense<0.000000e+00> : vector<16x128xf32>
    %14 = tpu.matmul %11, %13, %cst_10 {dimension_numbers = #tpu.dot_dimension_numbers<[1], [0], [0], [1], [0, 0, 1, 1], [], []>} : vector<16x64xf32>, vector<64x128xf32>, vector<16x128xf32> -> vector<16x128xf32>
    %15 = arith.addf %10, %14 : vector<16x128xf32>
    %c0_11 = arith.constant 0 : index
    %c0_12 = arith.constant 0 : index
    %16 = vector.load %arg3[%c0_11, %c0_12] : memref<1x128xf32, #tpu.memory_space<vmem>>, vector<1x128xf32>
    %17 = vector.broadcast %16 : vector<1x128xf32> to vector<16x128xf32>
    %18 = arith.addf %15, %17 : vector<16x128xf32>
    %cst_13 = arith.constant 0.000000e+00 : f32
    %19 = vector.broadcast %cst_13 : f32 to vector<16x128xf32>
    %20 = arith.cmpf oge, %18, %19 : vector<16x128xf32>
    %cst_14 = arith.constant 0.00999999977 : f32
    %21 = vector.broadcast %cst_14 : f32 to vector<16x128xf32>
    %22 = arith.mulf %21, %18 : vector<16x128xf32>
    %23 = arith.select %20, %18, %22 : vector<16x128xi1>, vector<16x128xf32>
    %cst_15 = arith.constant 0.000000e+00 : f32
    %24 = vector.broadcast %cst_15 : f32 to vector<1x128xf32>
    %25 = tpu.concatenate %24, %23, %24 in 0 : vector<1x128xf32>, vector<16x128xf32>, vector<1x128xf32> -> vector<18x128xf32>
    %26 = vector.extract_strided_slice %25 {offsets = [0, 0], sizes = [16, 128], strides = [1, 1]} : vector<18x128xf32> to vector<16x128xf32>
    %c0_16 = arith.constant 0 : index
    %c0_17 = arith.constant 0 : index
    %c0_18 = arith.constant 0 : index
    %27 = vector.load %arg4[%c0_16, %c0_17, %c0_18] : memref<3x128x128xf32, #tpu.memory_space<vmem>>, vector<1x128x128xf32>
    %28 = vector.shape_cast %27 : vector<1x128x128xf32> to vector<128x128xf32>
    %cst_19 = arith.constant dense<0.000000e+00> : vector<16x128xf32>
    %29 = tpu.matmul %26, %28, %cst_19 {dimension_numbers = #tpu.dot_dimension_numbers<[1], [0], [0], [1], [0, 0, 1, 1], [], []>} : vector<16x128xf32>, vector<128x128xf32>, vector<16x128xf32> -> vector<16x128xf32>
    %30 = vector.extract_strided_slice %25 {offsets = [1, 0], sizes = [16, 128], strides = [1, 1]} : vector<18x128xf32> to vector<16x128xf32>
    %c1_20 = arith.constant 1 : index
    %c0_21 = arith.constant 0 : index
    %c0_22 = arith.constant 0 : index
    %31 = vector.load %arg4[%c1_20, %c0_21, %c0_22] : memref<3x128x128xf32, #tpu.memory_space<vmem>>, vector<1x128x128xf32>
    %32 = vector.shape_cast %31 : vector<1x128x128xf32> to vector<128x128xf32>
    %cst_23 = arith.constant dense<0.000000e+00> : vector<16x128xf32>
    %33 = tpu.matmul %30, %32, %cst_23 {dimension_numbers = #tpu.dot_dimension_numbers<[1], [0], [0], [1], [0, 0, 1, 1], [], []>} : vector<16x128xf32>, vector<128x128xf32>, vector<16x128xf32> -> vector<16x128xf32>
    %34 = arith.addf %29, %33 : vector<16x128xf32>
    %35 = vector.extract_strided_slice %25 {offsets = [2, 0], sizes = [16, 128], strides = [1, 1]} : vector<18x128xf32> to vector<16x128xf32>
    %c2_24 = arith.constant 2 : index
    %c0_25 = arith.constant 0 : index
    %c0_26 = arith.constant 0 : index
    %36 = vector.load %arg4[%c2_24, %c0_25, %c0_26] : memref<3x128x128xf32, #tpu.memory_space<vmem>>, vector<1x128x128xf32>
    %37 = vector.shape_cast %36 : vector<1x128x128xf32> to vector<128x128xf32>
    %cst_27 = arith.constant dense<0.000000e+00> : vector<16x128xf32>
    %38 = tpu.matmul %35, %37, %cst_27 {dimension_numbers = #tpu.dot_dimension_numbers<[1], [0], [0], [1], [0, 0, 1, 1], [], []>} : vector<16x128xf32>, vector<128x128xf32>, vector<16x128xf32> -> vector<16x128xf32>
    %39 = arith.addf %34, %38 : vector<16x128xf32>
    %c0_28 = arith.constant 0 : index
    %c0_29 = arith.constant 0 : index
    %40 = vector.load %arg5[%c0_28, %c0_29] : memref<1x128xf32, #tpu.memory_space<vmem>>, vector<1x128xf32>
    %41 = vector.broadcast %40 : vector<1x128xf32> to vector<16x128xf32>
    %42 = arith.addf %39, %41 : vector<16x128xf32>
    %cst_30 = arith.constant 0.000000e+00 : f32
    %43 = vector.broadcast %cst_30 : f32 to vector<16x128xf32>
    %44 = arith.cmpf oge, %42, %43 : vector<16x128xf32>
    %cst_31 = arith.constant 0.00999999977 : f32
    %45 = vector.broadcast %cst_31 : f32 to vector<16x128xf32>
    %46 = arith.mulf %45, %42 : vector<16x128xf32>
    %47 = arith.select %44, %42, %46 : vector<16x128xi1>, vector<16x128xf32>
    %48 = vector.extract_strided_slice %1 {offsets = [1, 0], sizes = [16, 64], strides = [1, 1]} : vector<18x64xf32> to vector<16x64xf32>
    %c0_32 = arith.constant 0 : index
    %c0_33 = arith.constant 0 : index
    %49 = vector.load %arg6[%c0_32, %c0_33] : memref<64x128xf32, #tpu.memory_space<vmem>>, vector<64x128xf32>
    %cst_34 = arith.constant dense<0.000000e+00> : vector<16x128xf32>
    %50 = tpu.matmul %48, %49, %cst_34 {dimension_numbers = #tpu.dot_dimension_numbers<[1], [0], [0], [1], [0, 0, 1, 1], [], []>} : vector<16x64xf32>, vector<64x128xf32>, vector<16x128xf32> -> vector<16x128xf32>
    %c0_35 = arith.constant 0 : index
    %c0_36 = arith.constant 0 : index
    %51 = vector.load %arg7[%c0_35, %c0_36] : memref<1x128xf32, #tpu.memory_space<vmem>>, vector<1x128xf32>
    %52 = vector.broadcast %51 : vector<1x128xf32> to vector<16x128xf32>
    %53 = arith.addf %50, %52 : vector<16x128xf32>
    %54 = arith.addf %47, %53 : vector<16x128xf32>
    %c0_37 = arith.constant 0 : index
    %c0_38 = arith.constant 0 : index
    %c0_39 = arith.constant 0 : index
    %55 = vector.load %arg8[%c0_37, %c0_38, %c0_39] : memref<1x16x128xf32, #tpu.memory_space<vmem>>, vector<1x16x128xf32>
    %56 = vector.shape_cast %55 : vector<1x16x128xf32> to vector<16x128xf32>
    %57 = vector.shape_cast %54 : vector<16x128xf32> to vector<1x16x128xf32>
    tpu.vector_store %arg8[%c0_37, %c0_38, %c0_39], %57 {strides = array<i32>} : memref<1x16x128xf32, #tpu.memory_space<vmem>>, vector<1x16x128xf32>,
    return
  }
  func.func @transform_0(%arg0: i32) -> (i32, i32, i32) {
    %c0_i32 = arith.constant 0 : i32
    %c0_i32_0 = arith.constant 0 : i32
    %c0_i32_1 = arith.constant 0 : i32
    return %arg0, %c0_i32, %c0_i32_0 : i32, i32, i32
  }
  func.func @transform_1(%arg0: i32) -> (i32, i32, i32) {
    %c0_i32 = arith.constant 0 : i32
    %c0_i32_0 = arith.constant 0 : i32
    %c0_i32_1 = arith.constant 0 : i32
    %c0_i32_2 = arith.constant 0 : i32
    return %c0_i32, %c0_i32_0, %c0_i32_1 : i32, i32, i32
  }
  func.func @transform_2(%arg0: i32) -> (i32, i32) {
    %c0_i32 = arith.constant 0 : i32
    %c0_i32_0 = arith.constant 0 : i32
    %c0_i32_1 = arith.constant 0 : i32
    return %c0_i32, %c0_i32_0 : i32, i32
  }
  func.func @transform_3(%arg0: i32) -> (i32, i32, i32) {
    %c0_i32 = arith.constant 0 : i32
    %c0_i32_0 = arith.constant 0 : i32
    %c0_i32_1 = arith.constant 0 : i32
    %c0_i32_2 = arith.constant 0 : i32
    return %c0_i32, %c0_i32_0, %c0_i32_1 : i32, i32, i32
  }
  func.func @transform_4(%arg0: i32) -> (i32, i32) {
    %c0_i32 = arith.constant 0 : i32
    %c0_i32_0 = arith.constant 0 : i32
    %c0_i32_1 = arith.constant 0 : i32
    return %c0_i32, %c0_i32_0 : i32, i32
  }
  func.func @transform_5(%arg0: i32) -> (i32, i32) {
    %c0_i32 = arith.constant 0 : i32
    %c0_i32_0 = arith.constant 0 : i32
    %c0_i32_1 = arith.constant 0 : i32
    return %c0_i32, %c0_i32_0 : i32, i32
  }
  func.func @transform_6(%arg0: i32) -> (i32, i32) {
    %c0_i32 = arith.constant 0 : i32
    %c0_i32_0 = arith.constant 0 : i32
    %c0_i32_1 = arith.constant 0 : i32
    return %c0_i32, %c0_i32_0 : i32, i32
  }
  func.func @transform_7(%arg0: i32) -> (i32, i32, i32) {
    %c0_i32 = arith.constant 0 : i32
    %c0_i32_0 = arith.constant 0 : i32
    %c0_i32_1 = arith.constant 0 : i32
    return %arg0, %c0_i32, %c0_i32_0 : i32, i32, i32
  }
}

</mosaic_0001>

<llo_original>
// kernel: tile.18
$region0: #{tile.18}
  #allocation0 [shape = 's32[1]{0}', space=sflag, size = 0x4, scoped, tag = 'scoped memory for tile.18']
  %s0 = inlined_call_operand.vmem [shape: f32[8], index: 0, kind: input, shape index: {}]
  %s1 = inlined_call_operand.vmem [shape: f32[16,8], index: 1, kind: output, shape index: {}]
  // Predicated region
  $region2: #{tile.18} parent=0 // pred_check
    _
  $region3: #{tile.18} parent=0 // pred_check_branch
    %3 = sbr.rel (0) target = $region5
  $region4: #{tile.18} parent=0 // pred_region
    _
  $region5: #{tile.18} parent=0 // pred_fallthru
    _
  %v4 = vld [vmem:[%s0] ss:$0 sm:$0xff]
  %5 = vst [vmem:[%s1] sm:$0xff] %v4
  %s6 = scalar_lea.vmem %s1, 8
  %7 = vst [vmem:[%s6] sm:$0xff] %v4

// kernel: tile.19
$region0: #{tile.19}
  %s0 = inlined_call_operand.vmem [shape: f32[16,8], index: 0, kind: input, shape index: {}]
  %s1 = inlined_call_operand.vmem [shape: f32[1,128], index: 1, kind: output, shape index: {}]
  $region1: #{tile.19} parent=0
    #allocation0 [shape = 'u8[4096]{0}', space=vmem, size = 0x1000, scoped, tag = 'scoped mem for output reshape']
    %v2 = vld [vmem:[%s0] sm:$0x1]
    %vm3 = vcmask 64512
    %4 = vst.msk [vmem:[#allocation0] sm:$0x1] %vm3, %v2
    %s5 = scalar_lea.vmem %s0, 15
    %v6 = vld [vmem:[%s5] sm:$0x1]
    %7 = vrot.lane.b32.xlu0 %v6, 120
    %v8 = vpop.permute.xlu0 %7
    %vm9 = vcmask 1048512
    %10 = vst.msk [vmem:[#allocation0] sm:$0x1] %vm9, %v8
    %s11 = scalar_lea.vmem %s0, 14
    %v12 = vld [vmem:[%s11] sm:$0x1]
    %13 = vrot.lane.b32.xlu0 %v12, 112
    %v14 = vpop.permute.xlu0 %13
    %vm15 = vcmask 982912
    %16 = vst.msk [vmem:[#allocation0] sm:$0x1] %vm15, %v14
    %s17 = scalar_lea.vmem %s0, 13
    %v18 = vld [vmem:[%s17] sm:$0x1]
    %19 = vrot.lane.b32.xlu0 %v18, 104
    %v20 = vpop.permute.xlu0 %19
    %vm21 = vcmask 917312
    %22 = vst.msk [vmem:[#allocation0] sm:$0x1] %vm21, %v20
    %s23 = scalar_lea.vmem %s0, 12
    %v24 = vld [vmem:[%s23] sm:$0x1]
    %25 = vrot.lane.b32.xlu0 %v24, 96
    %v26 = vpop.permute.xlu0 %25
    %vm27 = vcmask 851712
    %28 = vst.msk [vmem:[#allocation0] sm:$0x1] %vm27, %v26
    %s29 = scalar_lea.vmem %s0, 11
    %v30 = vld [vmem:[%s29] sm:$0x1]
    %31 = vrot.lane.b32.xlu0 %v30, 88
    %v32 = vpop.permute.xlu0 %31
    %vm33 = vcmask 786112
    %34 = vst.msk [vmem:[#allocation0] sm:$0x1] %vm33, %v32
    %s35 = scalar_lea.vmem %s0, 10
    %v36 = vld [vmem:[%s35] sm:$0x1]
    %37 = vrot.lane.b32.xlu0 %v36, 80
    %v38 = vpop.permute.xlu0 %37
    %vm39 = vcmask 720512
    %40 = vst.msk [vmem:[#allocation0] sm:$0x1] %vm39, %v38
    %s41 = scalar_lea.vmem %s0, 9
    %v42 = vld [vmem:[%s41] sm:$0x1]
    %43 = vrot.lane.b32.xlu0 %v42, 72
    %v44 = vpop.permute.xlu0 %43
    %vm45 = vcmask 654912
    %46 = vst.msk [vmem:[#allocation0] sm:$0x1] %vm45, %v44
    %s47 = scalar_lea.vmem %s0, 8
    %v48 = vld [vmem:[%s47] sm:$0x1]
    %49 = vrot.lane.b32.xlu0 %v48, 64
    %v50 = vpop.permute.xlu0 %49
    %vm51 = vcmask 589312
    %52 = vst.msk [vmem:[#allocation0] sm:$0x1] %vm51, %v50
    %s53 = scalar_lea.vmem %s0, 7
    %v54 = vld [vmem:[%s53] sm:$0x1]
    %55 = vrot.lane.b32.xlu0 %v54, 56
    %v56 = vpop.permute.xlu0 %55
    %vm57 = vcmask 523712
    %58 = vst.msk [vmem:[#allocation0] sm:$0x1] %vm57, %v56
    %s59 = scalar_lea.vmem %s0, 6
    %v60 = vld [vmem:[%s59] sm:$0x1]
    %61 = vrot.lane.b32.xlu0 %v60, 48
    %v62 = vpop.permute.xlu0 %61
    %vm63 = vcmask 458112
    %64 = vst.msk [vmem:[#allocation0] sm:$0x1] %vm63, %v62
    %s65 = scalar_lea.vmem %s0, 5
    %v66 = vld [vmem:[%s65] sm:$0x1]
    %67 = vrot.lane.b32.xlu0 %v66, 40
    %v68 = vpop.permute.xlu0 %67
    %vm69 = vcmask 392512
    %70 = vst.msk [vmem:[#allocation0] sm:$0x1] %vm69, %v68
    %s71 = scalar_lea.vmem %s0, 4
    %v72 = vld [vmem:[%s71] sm:$0x1]
    %73 = vrot.lane.b32.xlu0 %v72, 32
    %v74 = vpop.permute.xlu0 %73
    %vm75 = vcmask 326912
    %76 = vst.msk [vmem:[#allocation0] sm:$0x1] %vm75, %v74
    %s77 = scalar_lea.vmem %s0, 3
    %v78 = vld [vmem:[%s77] sm:$0x1]
    %79 = vrot.lane.b32.xlu0 %v78, 24
    %v80 = vpop.permute.xlu0 %79
    %vm81 = vcmask 261312
    %82 = vst.msk [vmem:[#allocation0] sm:$0x1] %vm81, %v80
    %s83 = scalar_lea.vmem %s0, 2
    %v84 = vld [vmem:[%s83] sm:$0x1]
    %85 = vrot.lane.b32.xlu0 %v84, 16
    %v86 = vpop.permute.xlu0 %85
    %vm87 = vcmask 195712
    %88 = vst.msk [vmem:[#allocation0] sm:$0x1] %vm87, %v86
    %s89 = scalar_lea.vmem %s0, 1
    %v90 = vld [vmem:[%s89] sm:$0x1]
    %91 = vrot.lane.b32.xlu0 %v90, 8
    %v92 = vpop.permute.xlu0 %91
    %vm93 = vcmask 130112
    %94 = vst.msk [vmem:[#allocation0] sm:$0x1] %vm93, %v92
    %s96 = sshllo.u32 0, 1
    %v98 = vld [vmem:[#allocation0] sm:%s96]
    %s99 = sshllo.u32 0, 1
    %100 = vst [vmem:[%s1] sm:%s99] %v98

// kernel: residual_block.1
$region0: #{residual_block.1}
  #allocation0 [shape = 'u32[]', space=smem, size = 0x4, offset = 0x4, fixed_abs, tag = 'smem constant byte address 0x4 - core index']
  #allocation1 [shape = 'u32[144,128]{1,0:T(1,128)}', space=vmem, size = 0x12000, scoped, tag = 'internal scratch']
  %s0 = inlined_call_operand.vmem [shape: f32[2,18,64], index: 0, kind: input, shape index: {}]
  %s1 = inlined_call_operand.vmem [shape: f32[3,64,128], index: 1, kind: input, shape index: {}]
  %s2 = inlined_call_operand.vmem [shape: f32[1,128], index: 2, kind: input, shape index: {}]
  %s3 = inlined_call_operand.vmem [shape: f32[3,128,128], index: 3, kind: input, shape index: {}]
  %s4 = inlined_call_operand.vmem [shape: f32[1,128], index: 4, kind: input, shape index: {}]
  %s5 = inlined_call_operand.vmem [shape: f32[64,128], index: 5, kind: input, shape index: {}]
  %s6 = inlined_call_operand.vmem [shape: f32[1,128], index: 6, kind: input, shape index: {}]
  %s7 = inlined_call_operand.vmem [shape: f32[2,16,128], index: 7, kind: output, shape index: {}]
  %s8 = sld [smem:[#allocation0]]
  $region61: #{residual_block.1} parent=0
    _
  %s10 = ssub.s32 1, %s8
  %s11 = scalar_select 0, %s10, %s8
  loop: start=0, step=1, limit=4
  $region2: #{residual_block.1} parent=0 // loop_pre_header
    _
  $region3: #{residual_block.1} parent=0 // loop_header
    %s13 = sphi 0, %s17
    %p14 = scmp.ge.s32.totalorder %s13, 4
    %s23 = sphi 0, %s25
    %s26 = sphi 0, %s23
    %s27 = sphi 0, %s26
    %s43 = sphi 0, %s27
    %s47 = sphi 0, %s47
    %s49 = sphi 0, %s47
    %s50 = sphi 0, %s49
    %s64 = sphi 0, %s50
    %s68 = sphi 0, %s68
    %s70 = sphi 0, %s68
    %s71 = sphi 0, %s70
    %s85 = sphi 0, %s71
    %s89 = sphi 0, %s89
    %s91 = sphi 0, %s89
    %s92 = sphi 0, %s91
    %s106 = sphi 0, %s92
    %s110 = sphi 0, %s110
    %s112 = sphi 0, %s110
    %s113 = sphi 0, %s112
    %s127 = sphi 0, %s113
    %s131 = sphi 0, %s131
    %s133 = sphi 0, %s131
    %s134 = sphi 0, %s133
    %s148 = sphi 0, %s134
    %s152 = sphi 0, %s152
    %s154 = sphi 0, %s152
    %s155 = sphi 0, %s154
    %s169 = sphi 0, %s155
    %s175 = sphi 0, %s177
    %s178 = sphi 0, %s175
    %s179 = sphi 0, %s178
    %s195 = sphi 0, %s179
  $region4: #{residual_block.1} parent=0 // loop_header_branch
    %16 = sbr.rel (%p14) target = $region8
  $region5: #{residual_block.1} parent=0 // loop_body
    %s18 = ssub.s32 %s13, 1
    %s19 = ssub.s32 %s13, 2
    %s20 = sadd.s32 %s13, 1
    %s21 = ssub.s32 %s13, %s20
    %p22 = scmp.eq.s32.totalorder %s21, 0
    %s24 = sadd.s32 %s23, 1
    %s25 = scalar_select %p22, %s23, %s24
    %p28 = pneg %p22
    %p29 = scmp.eq.s32.totalorder %s13, 1
    %p30 = por %p28, %p29
    %p31 = scmp.ne.s32.totalorder %s23, %s26
    %p32 = scmp.eq.s32.totalorder %s13, 0
    %p33 = por %p31, %p32
    %p34 = scmp.ne.s32.totalorder %s23, %s26
    %p35 = scmp.eq.s32.totalorder %s18, 1
    %p36 = por %p34, %p35
    %p37 = scmp.ne.s32.totalorder %s26, %s27
    %p38 = scmp.eq.s32.totalorder %s18, 0
    %p39 = por %p37, %p38
    %p40 = scmp.ne.s32.totalorder %s26, %s27
    %p41 = scmp.eq.s32.totalorder %s19, 1
    %p42 = por %p40, %p41
    %p44 = scmp.ne.s32.totalorder %s27, %s43
    %p45 = scmp.eq.s32.totalorder %s19, 0
    %p46 = por %p44, %p45
    %s48 = sadd.s32 %s47, 1
    %p51 = scmp.eq.s32.totalorder %s13, 1
    %p52 = scmp.ne.s32.totalorder %s47, %s49
    %p53 = scmp.eq.s32.totalorder %s13, 0
    %p54 = por %p52, %p53
    %p55 = scmp.ne.s32.totalorder %s47, %s49
    %p56 = scmp.eq.s32.totalorder %s18, 1
    %p57 = por %p55, %p56
    %p58 = scmp.ne.s32.totalorder %s49, %s50
    %p59 = scmp.eq.s32.totalorder %s18, 0
    %p60 = por %p58, %p59
    %p61 = scmp.ne.s32.totalorder %s49, %s50
    %p62 = scmp.eq.s32.totalorder %s19, 1
    %p63 = por %p61, %p62
    %p65 = scmp.ne.s32.totalorder %s50, %s64
    %p66 = scmp.eq.s32.totalorder %s19, 0
    %p67 = por %p65, %p66
    %s69 = sadd.s32 %s68, 1
    %p72 = scmp.eq.s32.totalorder %s13, 1
    %p73 = scmp.ne.s32.totalorder %s68, %s70
    %p74 = scmp.eq.s32.totalorder %s13, 0
    %p75 = por %p73, %p74
    %p76 = scmp.ne.s32.totalorder %s68, %s70
    %p77 = scmp.eq.s32.totalorder %s18, 1
    %p78 = por %p76, %p77
    %p79 = scmp.ne.s32.totalorder %s70, %s71
    %p80 = scmp.eq.s32.totalorder %s18, 0
    %p81 = por %p79, %p80
    %p82 = scmp.ne.s32.totalorder %s70, %s71
    %p83 = scmp.eq.s32.totalorder %s19, 1
    %p84 = por %p82, %p83
    %p86 = scmp.ne.s32.totalorder %s71, %s85
    %p87 = scmp.eq.s32.totalorder %s19, 0
    %p88 = por %p86, %p87
    %s90 = sadd.s32 %s89, 1
    %p93 = scmp.eq.s32.totalorder %s13, 1
    %p94 = scmp.ne.s32.totalorder %s89, %s91
    %p95 = scmp.eq.s32.totalorder %s13, 0
    %p96 = por %p94, %p95
    %p97 = scmp.ne.s32.totalorder %s89, %s91
    %p98 = scmp.eq.s32.totalorder %s18, 1
    %p99 = por %p97, %p98
    %p100 = scmp.ne.s32.totalorder %s91, %s92
    %p101 = scmp.eq.s32.totalorder %s18, 0
    %p102 = por %p100, %p101
    %p103 = scmp.ne.s32.totalorder %s91, %s92
    %p104 = scmp.eq.s32.totalorder %s19, 1
    %p105 = por %p103, %p104
    %p107 = scmp.ne.s32.totalorder %s92, %s106
    %p108 = scmp.eq.s32.totalorder %s19, 0
    %p109 = por %p107, %p108
    %s111 = sadd.s32 %s110, 1
    %p114 = scmp.eq.s32.totalorder %s13, 1
    %p115 = scmp.ne.s32.totalorder %s110, %s112
    %p116 = scmp.eq.s32.totalorder %s13, 0
    %p117 = por %p115, %p116
    %p118 = scmp.ne.s32.totalorder %s110, %s112
    %p119 = scmp.eq.s32.totalorder %s18, 1
    %p120 = por %p118, %p119
    %p121 = scmp.ne.s32.totalorder %s112, %s113
    %p122 = scmp.eq.s32.totalorder %s18, 0
    %p123 = por %p121, %p122
    %p124 = scmp.ne.s32.totalorder %s112, %s113
    %p125 = scmp.eq.s32.totalorder %s19, 1
    %p126 = por %p124, %p125
    %p128 = scmp.ne.s32.totalorder %s113, %s127
    %p129 = scmp.eq.s32.totalorder %s19, 0
    %p130 = por %p128, %p129
    %s132 = sadd.s32 %s131, 1
    %p135 = scmp.eq.s32.totalorder %s13, 1
    %p136 = scmp.ne.s32.totalorder %s131, %s133
    %p137 = scmp.eq.s32.totalorder %s13, 0
    %p138 = por %p136, %p137
    %p139 = scmp.ne.s32.totalorder %s131, %s133
    %p140 = scmp.eq.s32.totalorder %s18, 1
    %p141 = por %p139, %p140
    %p142 = scmp.ne.s32.totalorder %s133, %s134
    %p143 = scmp.eq.s32.totalorder %s18, 0
    %p144 = por %p142, %p143
    %p145 = scmp.ne.s32.totalorder %s133, %s134
    %p146 = scmp.eq.s32.totalorder %s19, 1
    %p147 = por %p145, %p146
    %p149 = scmp.ne.s32.totalorder %s134, %s148
    %p150 = scmp.eq.s32.totalorder %s19, 0
    %p151 = por %p149, %p150
    %s153 = sadd.s32 %s152, 1
    %p156 = scmp.eq.s32.totalorder %s13, 1
    %p157 = scmp.ne.s32.totalorder %s152, %s154
    %p158 = scmp.eq.s32.totalorder %s13, 0
    %p159 = por %p157, %p158
    %p160 = scmp.ne.s32.totalorder %s152, %s154
    %p161 = scmp.eq.s32.totalorder %s18, 1
    %p162 = por %p160, %p161
    %p163 = scmp.ne.s32.totalorder %s154, %s155
    %p164 = scmp.eq.s32.totalorder %s18, 0
    %p165 = por %p163, %p164
    %p166 = scmp.ne.s32.totalorder %s154, %s155
    %p167 = scmp.eq.s32.totalorder %s19, 1
    %p168 = por %p166, %p167
    %p170 = scmp.ne.s32.totalorder %s155, %s169
    %p171 = scmp.eq.s32.totalorder %s19, 0
    %p172 = por %p170, %p171
    %s173 = ssub.s32 %s13, %s20
    %p174 = scmp.eq.s32.totalorder %s173, 0
    %s176 = sadd.s32 %s175, 1
    %s177 = scalar_select %p174, %s175, %s176
    %p180 = pneg %p174
    %p181 = scmp.eq.s32.totalorder %s13, 1
    %p182 = por %p180, %p181
    %p183 = scmp.ne.s32.totalorder %s175, %s178
    %p184 = scmp.eq.s32.totalorder %s13, 0
    %p185 = por %p183, %p184
    %p186 = scmp.ne.s32.totalorder %s175, %s178
    %p187 = scmp.eq.s32.totalorder %s18, 1
    %p188 = por %p186, %p187
    %p189 = scmp.ne.s32.totalorder %s178, %s179
    %p190 = scmp.eq.s32.totalorder %s18, 0
    %p191 = por %p189, %p190
    %p192 = scmp.ne.s32.totalorder %s178, %s179
    %p193 = scmp.eq.s32.totalorder %s19, 1
    %p194 = por %p192, %p193
    %p196 = scmp.ne.s32.totalorder %s179, %s195
    %p197 = scmp.eq.s32.totalorder %s19, 0
    %p198 = por %p196, %p197
    %p199 = scmp.le.s32.totalorder 1, %s13
    %p200 = scmp.lt.s32.totalorder %s13, 3
    %p201 = pnand %p199, %p200
    %p202 = pneg %p201
    // Predicated region
    $region9: #{residual_block.1} parent=5 // pred_check
      _
    $region10: #{residual_block.1} parent=5 // pred_check_branch
      %204 = sbr.rel (%p201) target = $region12
    $region11: #{residual_block.1} parent=5 // pred_region
      %s205 = ssub.s32 %s13, 1
      // Predicated region
      $region13: #{residual_block.1} parent=11 // pred_check
        %p206 = pneg %p60
      $region14: #{residual_block.1} parent=11 // pred_check_branch
        %208 = sbr.rel (%p206) target = $region16
      $region15: #{residual_block.1} parent=11 // pred_region
        _
      $region16: #{residual_block.1} parent=11 // pred_fallthru
        _
      // Predicated region
      $region17: #{residual_block.1} parent=11 // pred_check
        %p209 = pneg %p81
      $region18: #{residual_block.1} parent=11 // pred_check_branch
        %211 = sbr.rel (%p209) target = $region20
      $region19: #{residual_block.1} parent=11 // pred_region
        _
      $region20: #{residual_block.1} parent=11 // pred_fallthru
        _
      // Predicated region
      $region21: #{residual_block.1} parent=11 // pred_check
        %p212 = pneg %p102
      $region22: #{residual_block.1} parent=11 // pred_check_branch
        %214 = sbr.rel (%p212) target = $region24
      $region23: #{residual_block.1} parent=11 // pred_region
        _
      $region24: #{residual_block.1} parent=11 // pred_fallthru
        _
      // Predicated region
      $region25: #{residual_block.1} parent=11 // pred_check
        %p215 = pneg %p123
      $region26: #{residual_block.1} parent=11 // pred_check_branch
        %217 = sbr.rel (%p215) target = $region28
      $region27: #{residual_block.1} parent=11 // pred_region
        _
      $region28: #{residual_block.1} parent=11 // pred_fallthru
        _
      // Predicated region
      $region29: #{residual_block.1} parent=11 // pred_check
        %p218 = pneg %p144
      $region30: #{residual_block.1} parent=11 // pred_check_branch
        %220 = sbr.rel (%p218) target = $region32
      $region31: #{residual_block.1} parent=11 // pred_region
        _
      $region32: #{residual_block.1} parent=11 // pred_fallthru
        _
      // Predicated region
      $region33: #{residual_block.1} parent=11 // pred_check
        %p221 = pneg %p165
      $region34: #{residual_block.1} parent=11 // pred_check_branch
        %223 = sbr.rel (%p221) target = $region36
      $region35: #{residual_block.1} parent=11 // pred_region
        _
      $region36: #{residual_block.1} parent=11 // pred_fallthru
        _
    $region12: #{residual_block.1} parent=5 // pred_fallthru
      _
    %p224 = scmp.lt.s32.totalorder %s13, 2
    // Predicated region
    $region37: #{residual_block.1} parent=5 // pred_check
      %p225 = pneg %p224
    $region38: #{residual_block.1} parent=5 // pred_check_branch
      %227 = sbr.rel (%p225) target = $region40
    $region39: #{residual_block.1} parent=5 // pred_region
      // Predicated region
      $region41: #{residual_block.1} parent=39 // pred_check
        %p228 = pneg %p33
      $region42: #{residual_block.1} parent=39 // pred_check_branch
        %230 = sbr.rel (%p228) target = $region44
      $region43: #{residual_block.1} parent=39 // pred_region
        %p231 = scmp.lt.s32.totalorder %s13, 1
        %s232 = scalar_select %p231, %s13, 1
        %s233 = smul.addr %s232, 3
        %s234 = smul.addr %s233, 8
        %s235 = scalar_lea.vmem %s0, %s234
      $region44: #{residual_block.1} parent=39 // pred_fallthru
        _
    $region40: #{residual_block.1} parent=5 // pred_fallthru
      _
    %p236 = scmp.le.s32.totalorder 1, %s13
    %p237 = scmp.lt.s32.totalorder %s13, 3
    %p238 = pnand %p236, %p237
    %p239 = pneg %p238
    // Predicated region
    $region45: #{residual_block.1} parent=5 // pred_check
      _
    $region46: #{residual_block.1} parent=5 // pred_check_branch
      %241 = sbr.rel (%p238) target = $region48
    $region47: #{residual_block.1} parent=5 // pred_region
      %s242 = ssub.s32 %s13, 1
      %p243 = scmp.lt.s32.totalorder %s18, 1
      %s244 = scalar_select %p243, %s18, 1
      %s245 = smul.addr %s244, 3
      %s246 = smul.addr %s245, 8
      %s247 = scalar_lea.vmem %s0, %s246
      %p248 = pneg %p39
      %p249 = pneg %p36
      %p250 = pneg %p60
      %p251 = pneg %p57
      %p252 = pneg %p81
      %p253 = pneg %p78
      %p254 = pneg %p102
      %p255 = pneg %p99
      %p256 = pneg %p123
      %p257 = pneg %p120
      %p258 = pneg %p144
      %p259 = pneg %p141
      %p260 = pneg %p165
      %p261 = pneg %p162
      %p262 = pneg %p191
      %p263 = pneg %p188
      %p264 = scmp.lt.s32.totalorder %s18, 1
      %s265 = scalar_select %p264, %s18, 1
      %s266 = smul.addr %s265, 2
      %s267 = smul.addr %s266, 8
      %s268 = scalar_lea.vmem %s7, %s267
      %p269 = scmp.lt.s32.totalorder %s18, 1
      %s270 = scalar_select %p269, %s18, 1
      %s271 = smul.addr %s270, 3
      %s272 = smul.addr %s271, 8
      %s273 = scalar_lea.vmem %s0, %s272
      %p274 = scmp.lt.s32.totalorder %s18, 1
      %s275 = scalar_select %p274, %s18, 1
      %s276 = smul.addr %s275, 2
      %s277 = smul.addr %s276, 8
      %s278 = scalar_lea.vmem %s7, %s277
      %v279 = vld [vmem:[%s273] sm:$0xff]
      %v280 = vld [vmem:[%s273 + $0x8] sm:$0xff]
      %v281 = vld [vmem:[%s273 + $0x10] sm:$0x3]
      %v282 = vld [vmem:[%s1] sm:$0xff]
      %v283 = vld [vmem:[%s1 + $0x8] sm:$0xff]
      %v284 = vld [vmem:[%s1 + $0x10] sm:$0xff]
      %v285 = vld [vmem:[%s1 + $0x18] sm:$0xff]
      %v286 = vld [vmem:[%s1 + $0x20] sm:$0xff]
      %v287 = vld [vmem:[%s1 + $0x28] sm:$0xff]
      %v288 = vld [vmem:[%s1 + $0x30] sm:$0xff]
      %v289 = vld [vmem:[%s1 + $0x38] sm:$0xff]
      %s290 = scalar_lea.vmem %s1, 64
      %v291 = vld [vmem:[%s290] sm:$0xff]
      %v292 = vld [vmem:[%s290 + $0x8] sm:$0xff]
      %v293 = vld [vmem:[%s290 + $0x10] sm:$0xff]
      %v294 = vld [vmem:[%s290 + $0x18] sm:$0xff]
      %v295 = vld [vmem:[%s290 + $0x20] sm:$0xff]
      %v296 = vld [vmem:[%s290 + $0x28] sm:$0xff]
      %v297 = vld [vmem:[%s290 + $0x30] sm:$0xff]
      %v298 = vld [vmem:[%s290 + $0x38] sm:$0xff]
      %vm302 = vcmask 1046528
      %v303 = vrot.slane %v279, 1
      %v304 = vrot.slane %v280, 1
      %v305 = vsel %vm302, %v303, %v304
      %v306 = vrot.slane %v281, 1
      %v307 = vsel %vm302, %v304, %v306
      %vm308 = vcmask 523264
      %v309 = vsel %vm308, %v305, 0
      %v311 = vsel %vm308, %v307, 0
      %313 = vmatprep.subr.mxu0 0.0
      %314 = vmatpush1.msra.mxu0 %v291
      %315 = vmatprep.subr.mxu0 0.0
      %316 = vmatpush1.msra.mxu0 %v292
      %317 = vmatprep.subr.mxu0 0.0
      %318 = vmatpush1.msra.mxu0 %v293
      %319 = vmatprep.subr.mxu0 0.0
      %320 = vmatpush1.msra.mxu0 %v294
      %321 = vmatprep.subr.mxu0 0.0
      %322 = vmatpush1.msra.mxu0 %v295
      %323 = vmatprep.subr.mxu0 0.0
      %324 = vmatpush1.msra.mxu0 %v296
      %325 = vmatprep.subr.mxu0 0.0
      %326 = vmatpush1.msra.mxu0 %v297
      %327 = vmatprep.subr.mxu0 0.0
      %328 = vmatpush1.msra.mxu0 %v298
      %329 = vmatprep.subr.mxu0 0.0
      %330 = vmatpush1.msra.mxu0 0.0
      %331 = vmatprep.subr.mxu0 0.0
      %332 = vmatpush1.msra.mxu0 0.0
      %333 = vmatprep.subr.mxu0 0.0
      %334 = vmatpush1.msra.mxu0 0.0
      %335 = vmatprep.subr.mxu0 0.0
      %336 = vmatpush1.msra.mxu0 0.0
      %337 = vmatprep.subr.mxu0 0.0
      %338 = vmatpush1.msra.mxu0 0.0
      %339 = vmatprep.subr.mxu0 0.0
      %340 = vmatpush1.msra.mxu0 0.0
      %341 = vmatprep.subr.mxu0 0.0
      %342 = vmatpush1.msra.mxu0 0.0
      %343 = vmatprep.subr.mxu0 0.0
      %344 = vmatpush1.msra.mxu0 0.0
      %345 = vmatprep.subr.mxu0 0.0
      %346 = vmatpush1.msra.mxu0 0.0
      %347 = vmatprep.subr.mxu0 0.0
      %348 = vmatpush1.msra.mxu0 0.0
      %349 = vmatprep.subr.mxu0 0.0
      %350 = vmatpush1.msra.mxu0 0.0
      %351 = vmatprep.subr.mxu0 0.0
      %352 = vmatpush1.msra.mxu0 0.0
      %353 = vmatprep.subr.mxu0 0.0
      %354 = vmatpush1.msra.mxu0 0.0
      %355 = vmatprep.subr.mxu0 0.0
      %356 = vmatpush1.msra.mxu0 0.0
      %357 = vmatprep.subr.mxu0 0.0
      %358 = vmatpush1.msra.mxu0 0.0
      %359 = vmatprep.subr.mxu0 0.0
      %360 = vmatpush1.msra.mxu0 0.0
      %361 = vmatprep.subr.mxu0 0.0
      %362 = vmatpush1.msra.mxu0 0.0
      %363 = vmatprep.subr.mxu0 0.0
      %364 = vmatpush1.msra.mxu0 0.0
      %365 = vmatprep.subr.mxu0 0.0
      %366 = vmatpush1.msra.mxu0 0.0
      %367 = vmatprep.subr.mxu0 0.0
      %368 = vmatpush1.msra.mxu0 0.0
      %369 = vmatprep.subr.mxu0 0.0
      %370 = vmatpush1.msra.mxu0 0.0
      %371 = vmatprep.subr.mxu0 0.0
      %372 = vmatpush1.msra.mxu0 0.0
      %373 = vmatprep.subr.mxu0 0.0
      %374 = vmatpush1.msra.mxu0 0.0
      %375 = vmatprep.subr.mxu0 0.0
      %376 = vmatpush1.msra.mxu0 0.0
      %377 = vmatprep.mubr.f32.mxu0 0.0
      %378 = vmatmul.mubr.f32.gmra.mrb[0].mxu0 %v309
      %v379 = vpop.f32.mrb[0].mxu0
      %v380 = vadd.f32 0.0, %v379
      %v381 = vpop.f32.mrb[0].mxu0
      %382 = vmatprep.mubr.f32.mxu0 0.0
      %383 = vmatmul.mubr.f32.gmra.mrb[0].mxu0 %v311
      %v384 = vpop.f32.mrb[0].mxu0
      %v385 = vadd.f32 0.0, %v384
      %v386 = vpop.f32.mrb[0].mxu0
      %387 = vdwg.mxu0
      %v388 = vsel %vm308, %v279, 0
      %v390 = vsel %vm308, %v280, 0
      %392 = vmatprep.subr.mxu0 0.0
      %393 = vmatpush1.msra.mxu0 %v282
      %394 = vmatprep.subr.mxu0 0.0
      %395 = vmatpush1.msra.mxu0 %v283
      %396 = vmatprep.subr.mxu0 0.0
      %397 = vmatpush1.msra.mxu0 %v284
      %398 = vmatprep.subr.mxu0 0.0
      %399 = vmatpush1.msra.mxu0 %v285
      %400 = vmatprep.subr.mxu0 0.0
      %401 = vmatpush1.msra.mxu0 %v286
      %402 = vmatprep.subr.mxu0 0.0
      %403 = vmatpush1.msra.mxu0 %v287
      %404 = vmatprep.subr.mxu0 0.0
      %405 = vmatpush1.msra.mxu0 %v288
      %406 = vmatprep.subr.mxu0 0.0
      %407 = vmatpush1.msra.mxu0 %v289
      %408 = vmatprep.subr.mxu0 0.0
      %409 = vmatpush1.msra.mxu0 0.0
      %410 = vmatprep.subr.mxu0 0.0
      %411 = vmatpush1.msra.mxu0 0.0
      %412 = vmatprep.subr.mxu0 0.0
      %413 = vmatpush1.msra.mxu0 0.0
      %414 = vmatprep.subr.mxu0 0.0
      %415 = vmatpush1.msra.mxu0 0.0
      %416 = vmatprep.subr.mxu0 0.0
      %417 = vmatpush1.msra.mxu0 0.0
      %418 = vmatprep.subr.mxu0 0.0
      %419 = vmatpush1.msra.mxu0 0.0
      %420 = vmatprep.subr.mxu0 0.0
      %421 = vmatpush1.msra.mxu0 0.0
      %422 = vmatprep.subr.mxu0 0.0
      %423 = vmatpush1.msra.mxu0 0.0
      %424 = vmatprep.subr.mxu0 0.0
      %425 = vmatpush1.msra.mxu0 0.0
      %426 = vmatprep.subr.mxu0 0.0
      %427 = vmatpush1.msra.mxu0 0.0
      %428 = vmatprep.subr.mxu0 0.0
      %429 = vmatpush1.msra.mxu0 0.0
      %430 = vmatprep.subr.mxu0 0.0
      %431 = vmatpush1.msra.mxu0 0.0
      %432 = vmatprep.subr.mxu0 0.0
      %433 = vmatpush1.msra.mxu0 0.0
      %434 = vmatprep.subr.mxu0 0.0
      %435 = vmatpush1.msra.mxu0 0.0
      %436 = vmatprep.subr.mxu0 0.0
      %437 = vmatpush1.msra.mxu0 0.0
      %438 = vmatprep.subr.mxu0 0.0
      %439 = vmatpush1.msra.mxu0 0.0
      %440 = vmatprep.subr.mxu0 0.0
      %441 = vmatpush1.msra.mxu0 0.0
      %442 = vmatprep.subr.mxu0 0.0
      %443 = vmatpush1.msra.mxu0 0.0
      %444 = vmatprep.subr.mxu0 0.0
      %445 = vmatpush1.msra.mxu0 0.0
      %446 = vmatprep.subr.mxu0 0.0
      %447 = vmatpush1.msra.mxu0 0.0
      %448 = vmatprep.subr.mxu0 0.0
      %449 = vmatpush1.msra.mxu0 0.0
      %450 = vmatprep.subr.mxu0 0.0
      %451 = vmatpush1.msra.mxu0 0.0
      %452 = vmatprep.subr.mxu0 0.0
      %453 = vmatpush1.msra.mxu0 0.0
      %454 = vmatprep.subr.mxu0 0.0
      %455 = vmatpush1.msra.mxu0 0.0
      %456 = vmatprep.mubr.f32.mxu0 0.0
      %457 = vmatmul.mubr.f32.gmra.mrb[0].mxu0 %v388
      %v458 = vpop.f32.mrb[0].mxu0
      %v459 = vadd.f32 %v380, %v458
      %v460 = vpop.f32.mrb[0].mxu0
      %461 = vmatprep.mubr.f32.mxu0 0.0
      %462 = vmatmul.mubr.f32.gmra.mrb[0].mxu0 %v390
      %v463 = vpop.f32.mrb[0].mxu0
      %v464 = vadd.f32 %v385, %v463
      %v465 = vpop.f32.mrb[0].mxu0
      %466 = vdwg.mxu0
      %s467 = scalar_lea.vmem %s1, 128
      %v468 = vld [vmem:[%s467] sm:$0xff]
      %v469 = vld [vmem:[%s467 + $0x8] sm:$0xff]
      %v470 = vld [vmem:[%s467 + $0x10] sm:$0xff]
      %v471 = vld [vmem:[%s467 + $0x18] sm:$0xff]
      %v472 = vld [vmem:[%s467 + $0x20] sm:$0xff]
      %v473 = vld [vmem:[%s467 + $0x28] sm:$0xff]
      %v474 = vld [vmem:[%s467 + $0x30] sm:$0xff]
      %v475 = vld [vmem:[%s467 + $0x38] sm:$0xff]
      %vm476 = vcmask 1045504
      %v477 = vrot.slane %v279, 2
      %v478 = vrot.slane %v280, 2
      %v479 = vsel %vm476, %v477, %v478
      %v480 = vrot.slane %v281, 2
      %v481 = vsel %vm476, %v478, %v480
      %v482 = vsel %vm308, %v479, 0
      %v484 = vsel %vm308, %v481, 0
      %486 = vmatprep.subr.mxu0 0.0
      %487 = vmatpush1.msra.mxu0 %v468
      %488 = vmatprep.subr.mxu0 0.0
      %489 = vmatpush1.msra.mxu0 %v469
      %490 = vmatprep.subr.mxu0 0.0
      %491 = vmatpush1.msra.mxu0 %v470
      %492 = vmatprep.subr.mxu0 0.0
      %493 = vmatpush1.msra.mxu0 %v471
      %494 = vmatprep.subr.mxu0 0.0
      %495 = vmatpush1.msra.mxu0 %v472
      %496 = vmatprep.subr.mxu0 0.0
      %497 = vmatpush1.msra.mxu0 %v473
      %498 = vmatprep.subr.mxu0 0.0
      %499 = vmatpush1.msra.mxu0 %v474
      %500 = vmatprep.subr.mxu0 0.0
      %501 = vmatpush1.msra.mxu0 %v475
      %502 = vmatprep.subr.mxu0 0.0
      %503 = vmatpush1.msra.mxu0 0.0
      %504 = vmatprep.subr.mxu0 0.0
      %505 = vmatpush1.msra.mxu0 0.0
      %506 = vmatprep.subr.mxu0 0.0
      %507 = vmatpush1.msra.mxu0 0.0
      %508 = vmatprep.subr.mxu0 0.0
      %509 = vmatpush1.msra.mxu0 0.0
      %510 = vmatprep.subr.mxu0 0.0
      %511 = vmatpush1.msra.mxu0 0.0
      %512 = vmatprep.subr.mxu0 0.0
      %513 = vmatpush1.msra.mxu0 0.0
      %514 = vmatprep.subr.mxu0 0.0
      %515 = vmatpush1.msra.mxu0 0.0
      %516 = vmatprep.subr.mxu0 0.0
      %517 = vmatpush1.msra.mxu0 0.0
      %518 = vmatprep.subr.mxu0 0.0
      %519 = vmatpush1.msra.mxu0 0.0
      %520 = vmatprep.subr.mxu0 0.0
      %521 = vmatpush1.msra.mxu0 0.0
      %522 = vmatprep.subr.mxu0 0.0
      %523 = vmatpush1.msra.mxu0 0.0
      %524 = vmatprep.subr.mxu0 0.0
      %525 = vmatpush1.msra.mxu0 0.0
      %526 = vmatprep.subr.mxu0 0.0
      %527 = vmatpush1.msra.mxu0 0.0
      %528 = vmatprep.subr.mxu0 0.0
      %529 = vmatpush1.msra.mxu0 0.0
      %530 = vmatprep.subr.mxu0 0.0
      %531 = vmatpush1.msra.mxu0 0.0
      %532 = vmatprep.subr.mxu0 0.0
      %533 = vmatpush1.msra.mxu0 0.0
      %534 = vmatprep.subr.mxu0 0.0
      %535 = vmatpush1.msra.mxu0 0.0
      %536 = vmatprep.subr.mxu0 0.0
      %537 = vmatpush1.msra.mxu0 0.0
      %538 = vmatprep.subr.mxu0 0.0
      %539 = vmatpush1.msra.mxu0 0.0
      %540 = vmatprep.subr.mxu0 0.0
      %541 = vmatpush1.msra.mxu0 0.0
      %542 = vmatprep.subr.mxu0 0.0
      %543 = vmatpush1.msra.mxu0 0.0
      %544 = vmatprep.subr.mxu0 0.0
      %545 = vmatpush1.msra.mxu0 0.0
      %546 = vmatprep.subr.mxu0 0.0
      %547 = vmatpush1.msra.mxu0 0.0
      %548 = vmatprep.subr.mxu0 0.0
      %549 = vmatpush1.msra.mxu0 0.0
      %550 = vmatprep.mubr.f32.mxu0 0.0
      %551 = vmatmul.mubr.f32.gmra.mrb[0].mxu0 %v482
      %v552 = vpop.f32.mrb[0].mxu0
      %v553 = vadd.f32 0.0, %v552
      %v554 = vpop.f32.mrb[0].mxu0
      %555 = vmatprep.mubr.f32.mxu0 0.0
      %556 = vmatmul.mubr.f32.gmra.mrb[0].mxu0 %v484
      %v557 = vpop.f32.mrb[0].mxu0
      %v558 = vadd.f32 0.0, %v557
      %v559 = vpop.f32.mrb[0].mxu0
      %560 = vdwg.mxu0
      %v561 = vadd.f32 %v459, %v553
      %v562 = vadd.f32 %v464, %v558
      %v563 = vld [vmem:[%s2] sm:$0x1]
      %v565 = vlaneseq
      %v566 = vshrl.u32 %v565, 7
      %v567 = vsub.s32 0, %v566
      %v568 = vrot.slane %v563, %v567
      %v570 = vadd.f32 %v561, %v568
      %v571 = vadd.f32 %v562, %v568
      %vm572 = vcmp.ge.f32.partialorder %v570, 0.0
      %vm573 = vcmp.ge.f32.partialorder %v571, 0.0
      %v574 = vmul.f32 %v570, 0.01
      %v575 = vmul.f32 %v571, 0.01
      %v576 = vsel %vm572, %v570, %v574
      %v577 = vsel %vm573, %v571, %v575
      %vm580 = vcmask 1040384
      %v581 = vrot.slane %v576, 7
      %v582 = vrot.slane %v577, 7
      %v583 = vsel %vm580, %v581, %v582
      %v587 = vsel %vm580, 0.0, %v581
      %v588 = vsel %vm580, %v582, 0.0
      %v589 = vld [vmem:[%s3] sm:$0xff]
      %v590 = vld [vmem:[%s3 + $0x8] sm:$0xff]
      %v591 = vld [vmem:[%s3 + $0x10] sm:$0xff]
      %v592 = vld [vmem:[%s3 + $0x18] sm:$0xff]
      %v593 = vld [vmem:[%s3 + $0x20] sm:$0xff]
      %v594 = vld [vmem:[%s3 + $0x28] sm:$0xff]
      %v595 = vld [vmem:[%s3 + $0x30] sm:$0xff]
      %v596 = vld [vmem:[%s3 + $0x38] sm:$0xff]
      %v597 = vld [vmem:[%s3 + $0x40] sm:$0xff]
      %v598 = vld [vmem:[%s3 + $0x48] sm:$0xff]
      %v599 = vld [vmem:[%s3 + $0x50] sm:$0xff]
      %v600 = vld [vmem:[%s3 + $0x58] sm:$0xff]
      %v601 = vld [vmem:[%s3 + $0x60] sm:$0xff]
      %v602 = vld [vmem:[%s3 + $0x68] sm:$0xff]
      %v603 = vld [vmem:[%s3 + $0x70] sm:$0xff]
      %v604 = vld [vmem:[%s3 + $0x78] sm:$0xff]
      %s605 = scalar_lea.vmem %s3, 128
      %v606 = vld [vmem:[%s605] sm:$0xff]
      %v607 = vld [vmem:[%s605 + $0x8] sm:$0xff]
      %v608 = vld [vmem:[%s605 + $0x10] sm:$0xff]
      %v609 = vld [vmem:[%s605 + $0x18] sm:$0xff]
      %v610 = vld [vmem:[%s605 + $0x20] sm:$0xff]
      %v611 = vld [vmem:[%s605 + $0x28] sm:$0xff]
      %v612 = vld [vmem:[%s605 + $0x30] sm:$0xff]
      %v613 = vld [vmem:[%s605 + $0x38] sm:$0xff]
      %v614 = vld [vmem:[%s605 + $0x40] sm:$0xff]
      %v615 = vld [vmem:[%s605 + $0x48] sm:$0xff]
      %v616 = vld [vmem:[%s605 + $0x50] sm:$0xff]
      %v617 = vld [vmem:[%s605 + $0x58] sm:$0xff]
      %v618 = vld [vmem:[%s605 + $0x60] sm:$0xff]
      %v619 = vld [vmem:[%s605 + $0x68] sm:$0xff]
      %v620 = vld [vmem:[%s605 + $0x70] sm:$0xff]
      %v621 = vld [vmem:[%s605 + $0x78] sm:$0xff]
      %v624 = vrot.slane %v587, 1
      %v625 = vrot.slane %v583, 1
      %v626 = vsel %vm302, %v624, %v625
      %v627 = vrot.slane %v588, 1
      %v628 = vsel %vm302, %v625, %v627
      %631 = vmatprep.subr.mxu0 0.0
      %632 = vmatpush1.msra.mxu0 %v606
      %633 = vmatprep.subr.mxu0 0.0
      %634 = vmatpush1.msra.mxu0 %v607
      %635 = vmatprep.subr.mxu0 0.0
      %636 = vmatpush1.msra.mxu0 %v608
      %637 = vmatprep.subr.mxu0 0.0
      %638 = vmatpush1.msra.mxu0 %v609
      %639 = vmatprep.subr.mxu0 0.0
      %640 = vmatpush1.msra.mxu0 %v610
      %641 = vmatprep.subr.mxu0 0.0
      %642 = vmatpush1.msra.mxu0 %v611
      %643 = vmatprep.subr.mxu0 0.0
      %644 = vmatpush1.msra.mxu0 %v612
      %645 = vmatprep.subr.mxu0 0.0
      %646 = vmatpush1.msra.mxu0 %v613
      %647 = vmatprep.subr.mxu0 0.0
      %648 = vmatpush1.msra.mxu0 %v614
      %649 = vmatprep.subr.mxu0 0.0
      %650 = vmatpush1.msra.mxu0 %v615
      %651 = vmatprep.subr.mxu0 0.0
      %652 = vmatpush1.msra.mxu0 %v616
      %653 = vmatprep.subr.mxu0 0.0
      %654 = vmatpush1.msra.mxu0 %v617
      %655 = vmatprep.subr.mxu0 0.0
      %656 = vmatpush1.msra.mxu0 %v618
      %657 = vmatprep.subr.mxu0 0.0
      %658 = vmatpush1.msra.mxu0 %v619
      %659 = vmatprep.subr.mxu0 0.0
      %660 = vmatpush1.msra.mxu0 %v620
      %661 = vmatprep.subr.mxu0 0.0
      %662 = vmatpush1.msra.mxu0 %v621
      %663 = vmatprep.subr.mxu0 0.0
      %664 = vmatpush1.msra.mxu0 0.0
      %665 = vmatprep.subr.mxu0 0.0
      %666 = vmatpush1.msra.mxu0 0.0
      %667 = vmatprep.subr.mxu0 0.0
      %668 = vmatpush1.msra.mxu0 0.0
      %669 = vmatprep.subr.mxu0 0.0
      %670 = vmatpush1.msra.mxu0 0.0
      %671 = vmatprep.subr.mxu0 0.0
      %672 = vmatpush1.msra.mxu0 0.0
      %673 = vmatprep.subr.mxu0 0.0
      %674 = vmatpush1.msra.mxu0 0.0
      %675 = vmatprep.subr.mxu0 0.0
      %676 = vmatpush1.msra.mxu0 0.0
      %677 = vmatprep.subr.mxu0 0.0
      %678 = vmatpush1.msra.mxu0 0.0
      %679 = vmatprep.subr.mxu0 0.0
      %680 = vmatpush1.msra.mxu0 0.0
      %681 = vmatprep.subr.mxu0 0.0
      %682 = vmatpush1.msra.mxu0 0.0
      %683 = vmatprep.subr.mxu0 0.0
      %684 = vmatpush1.msra.mxu0 0.0
      %685 = vmatprep.subr.mxu0 0.0
      %686 = vmatpush1.msra.mxu0 0.0
      %687 = vmatprep.subr.mxu0 0.0
      %688 = vmatpush1.msra.mxu0 0.0
      %689 = vmatprep.subr.mxu0 0.0
      %690 = vmatpush1.msra.mxu0 0.0
      %691 = vmatprep.subr.mxu0 0.0
      %692 = vmatpush1.msra.mxu0 0.0
      %693 = vmatprep.subr.mxu0 0.0
      %694 = vmatpush1.msra.mxu0 0.0
      %695 = vmatprep.mubr.f32.mxu0 0.0
      %696 = vmatmul.mubr.f32.gmra.mrb[0].mxu0 %v626
      %v697 = vpop.f32.mrb[0].mxu0
      %v698 = vadd.f32 0.0, %v697
      %v699 = vpop.f32.mrb[0].mxu0
      %700 = vmatprep.mubr.f32.mxu0 0.0
      %701 = vmatmul.mubr.f32.gmra.mrb[0].mxu0 %v628
      %v702 = vpop.f32.mrb[0].mxu0
      %v703 = vadd.f32 0.0, %v702
      %v704 = vpop.f32.mrb[0].mxu0
      %705 = vdwg.mxu0
      %706 = vmatprep.subr.mxu0 0.0
      %707 = vmatpush1.msra.mxu0 %v589
      %708 = vmatprep.subr.mxu0 0.0
      %709 = vmatpush1.msra.mxu0 %v590
      %710 = vmatprep.subr.mxu0 0.0
      %711 = vmatpush1.msra.mxu0 %v591
      %712 = vmatprep.subr.mxu0 0.0
      %713 = vmatpush1.msra.mxu0 %v592
      %714 = vmatprep.subr.mxu0 0.0
      %715 = vmatpush1.msra.mxu0 %v593
      %716 = vmatprep.subr.mxu0 0.0
      %717 = vmatpush1.msra.mxu0 %v594
      %718 = vmatprep.subr.mxu0 0.0
      %719 = vmatpush1.msra.mxu0 %v595
      %720 = vmatprep.subr.mxu0 0.0
      %721 = vmatpush1.msra.mxu0 %v596
      %722 = vmatprep.subr.mxu0 0.0
      %723 = vmatpush1.msra.mxu0 %v597
      %724 = vmatprep.subr.mxu0 0.0
      %725 = vmatpush1.msra.mxu0 %v598
      %726 = vmatprep.subr.mxu0 0.0
      %727 = vmatpush1.msra.mxu0 %v599
      %728 = vmatprep.subr.mxu0 0.0
      %729 = vmatpush1.msra.mxu0 %v600
      %730 = vmatprep.subr.mxu0 0.0
      %731 = vmatpush1.msra.mxu0 %v601
      %732 = vmatprep.subr.mxu0 0.0
      %733 = vmatpush1.msra.mxu0 %v602
      %734 = vmatprep.subr.mxu0 0.0
      %735 = vmatpush1.msra.mxu0 %v603
      %736 = vmatprep.subr.mxu0 0.0
      %737 = vmatpush1.msra.mxu0 %v604
      %738 = vmatprep.subr.mxu0 0.0
      %739 = vmatpush1.msra.mxu0 0.0
      %740 = vmatprep.subr.mxu0 0.0
      %741 = vmatpush1.msra.mxu0 0.0
      %742 = vmatprep.subr.mxu0 0.0
      %743 = vmatpush1.msra.mxu0 0.0
      %744 = vmatprep.subr.mxu0 0.0
      %745 = vmatpush1.msra.mxu0 0.0
      %746 = vmatprep.subr.mxu0 0.0
      %747 = vmatpush1.msra.mxu0 0.0
      %748 = vmatprep.subr.mxu0 0.0
      %749 = vmatpush1.msra.mxu0 0.0
      %750 = vmatprep.subr.mxu0 0.0
      %751 = vmatpush1.msra.mxu0 0.0
      %752 = vmatprep.subr.mxu0 0.0
      %753 = vmatpush1.msra.mxu0 0.0
      %754 = vmatprep.subr.mxu0 0.0
      %755 = vmatpush1.msra.mxu0 0.0
      %756 = vmatprep.subr.mxu0 0.0
      %757 = vmatpush1.msra.mxu0 0.0
      %758 = vmatprep.subr.mxu0 0.0
      %759 = vmatpush1.msra.mxu0 0.0
      %760 = vmatprep.subr.mxu0 0.0
      %761 = vmatpush1.msra.mxu0 0.0
      %762 = vmatprep.subr.mxu0 0.0
      %763 = vmatpush1.msra.mxu0 0.0
      %764 = vmatprep.subr.mxu0 0.0
      %765 = vmatpush1.msra.mxu0 0.0
      %766 = vmatprep.subr.mxu0 0.0
      %767 = vmatpush1.msra.mxu0 0.0
      %768 = vmatprep.subr.mxu0 0.0
      %769 = vmatpush1.msra.mxu0 0.0
      %770 = vmatprep.mubr.f32.mxu0 0.0
      %771 = vmatmul.mubr.f32.gmra.mrb[0].mxu0 %v587
      %v772 = vpop.f32.mrb[0].mxu0
      %v773 = vadd.f32 %v698, %v772
      %v774 = vpop.f32.mrb[0].mxu0
      %775 = vmatprep.mubr.f32.mxu0 0.0
      %776 = vmatmul.mubr.f32.gmra.mrb[0].mxu0 %v583
      %v777 = vpop.f32.mrb[0].mxu0
      %v778 = vadd.f32 %v703, %v777
      %v779 = vpop.f32.mrb[0].mxu0
      %780 = vdwg.mxu0
      %s781 = scalar_lea.vmem %s3, 256
      %v782 = vld [vmem:[%s781] sm:$0xff]
      %v783 = vld [vmem:[%s781 + $0x8] sm:$0xff]
      %v784 = vld [vmem:[%s781 + $0x10] sm:$0xff]
      %v785 = vld [vmem:[%s781 + $0x18] sm:$0xff]
      %v786 = vld [vmem:[%s781 + $0x20] sm:$0xff]
      %v787 = vld [vmem:[%s781 + $0x28] sm:$0xff]
      %v788 = vld [vmem:[%s781 + $0x30] sm:$0xff]
      %v789 = vld [vmem:[%s781 + $0x38] sm:$0xff]
      %v790 = vld [vmem:[%s781 + $0x40] sm:$0xff]
      %v791 = vld [vmem:[%s781 + $0x48] sm:$0xff]
      %v792 = vld [vmem:[%s781 + $0x50] sm:$0xff]
      %v793 = vld [vmem:[%s781 + $0x58] sm:$0xff]
      %v794 = vld [vmem:[%s781 + $0x60] sm:$0xff]
      %v795 = vld [vmem:[%s781 + $0x68] sm:$0xff]
      %v796 = vld [vmem:[%s781 + $0x70] sm:$0xff]
      %v797 = vld [vmem:[%s781 + $0x78] sm:$0xff]
      %v798 = vrot.slane %v587, 2
      %v799 = vrot.slane %v583, 2
      %v800 = vsel %vm476, %v798, %v799
      %v801 = vrot.slane %v588, 2
      %v802 = vsel %vm476, %v799, %v801
      %805 = vmatprep.subr.mxu0 0.0
      %806 = vmatpush1.msra.mxu0 %v782
      %807 = vmatprep.subr.mxu0 0.0
      %808 = vmatpush1.msra.mxu0 %v783
      %809 = vmatprep.subr.mxu0 0.0
      %810 = vmatpush1.msra.mxu0 %v784
      %811 = vmatprep.subr.mxu0 0.0
      %812 = vmatpush1.msra.mxu0 %v785
      %813 = vmatprep.subr.mxu0 0.0
      %814 = vmatpush1.msra.mxu0 %v786
      %815 = vmatprep.subr.mxu0 0.0
      %816 = vmatpush1.msra.mxu0 %v787
      %817 = vmatprep.subr.mxu0 0.0
      %818 = vmatpush1.msra.mxu0 %v788
      %819 = vmatprep.subr.mxu0 0.0
      %820 = vmatpush1.msra.mxu0 %v789
      %821 = vmatprep.subr.mxu0 0.0
      %822 = vmatpush1.msra.mxu0 %v790
      %823 = vmatprep.subr.mxu0 0.0
      %824 = vmatpush1.msra.mxu0 %v791
      %825 = vmatprep.subr.mxu0 0.0
      %826 = vmatpush1.msra.mxu0 %v792
      %827 = vmatprep.subr.mxu0 0.0
      %828 = vmatpush1.msra.mxu0 %v793
      %829 = vmatprep.subr.mxu0 0.0
      %830 = vmatpush1.msra.mxu0 %v794
      %831 = vmatprep.subr.mxu0 0.0
      %832 = vmatpush1.msra.mxu0 %v795
      %833 = vmatprep.subr.mxu0 0.0
      %834 = vmatpush1.msra.mxu0 %v796
      %835 = vmatprep.subr.mxu0 0.0
      %836 = vmatpush1.msra.mxu0 %v797
      %837 = vmatprep.subr.mxu0 0.0
      %838 = vmatpush1.msra.mxu0 0.0
      %839 = vmatprep.subr.mxu0 0.0
      %840 = vmatpush1.msra.mxu0 0.0
      %841 = vmatprep.subr.mxu0 0.0
      %842 = vmatpush1.msra.mxu0 0.0
      %843 = vmatprep.subr.mxu0 0.0
      %844 = vmatpush1.msra.mxu0 0.0
      %845 = vmatprep.subr.mxu0 0.0
      %846 = vmatpush1.msra.mxu0 0.0
      %847 = vmatprep.subr.mxu0 0.0
      %848 = vmatpush1.msra.mxu0 0.0
      %849 = vmatprep.subr.mxu0 0.0
      %850 = vmatpush1.msra.mxu0 0.0
      %851 = vmatprep.subr.mxu0 0.0
      %852 = vmatpush1.msra.mxu0 0.0
      %853 = vmatprep.subr.mxu0 0.0
      %854 = vmatpush1.msra.mxu0 0.0
      %855 = vmatprep.subr.mxu0 0.0
      %856 = vmatpush1.msra.mxu0 0.0
      %857 = vmatprep.subr.mxu0 0.0
      %858 = vmatpush1.msra.mxu0 0.0
      %859 = vmatprep.subr.mxu0 0.0
      %860 = vmatpush1.msra.mxu0 0.0
      %861 = vmatprep.subr.mxu0 0.0
      %862 = vmatpush1.msra.mxu0 0.0
      %863 = vmatprep.subr.mxu0 0.0
      %864 = vmatpush1.msra.mxu0 0.0
      %865 = vmatprep.subr.mxu0 0.0
      %866 = vmatpush1.msra.mxu0 0.0
      %867 = vmatprep.subr.mxu0 0.0
      %868 = vmatpush1.msra.mxu0 0.0
      %869 = vmatprep.mubr.f32.mxu0 0.0
      %870 = vmatmul.mubr.f32.gmra.mrb[0].mxu0 %v800
      %v871 = vpop.f32.mrb[0].mxu0
      %v872 = vadd.f32 0.0, %v871
      %v873 = vpop.f32.mrb[0].mxu0
      %874 = vmatprep.mubr.f32.mxu0 0.0
      %875 = vmatmul.mubr.f32.gmra.mrb[0].mxu0 %v802
      %v876 = vpop.f32.mrb[0].mxu0
      %v877 = vadd.f32 0.0, %v876
      %v878 = vpop.f32.mrb[0].mxu0
      %879 = vdwg.mxu0
      %v880 = vadd.f32 %v773, %v872
      %v881 = vadd.f32 %v778, %v877
      %v882 = vld [vmem:[%s4] sm:$0x1]
      %v884 = vlaneseq
      %v885 = vshrl.u32 %v884, 7
      %v886 = vsub.s32 0, %v885
      %v887 = vrot.slane %v882, %v886
      %v889 = vadd.f32 %v880, %v887
      %v890 = vadd.f32 %v881, %v887
      %vm891 = vcmp.ge.f32.partialorder %v889, 0.0
      %vm892 = vcmp.ge.f32.partialorder %v890, 0.0
      %v893 = vmul.f32 %v889, 0.01
      %v894 = vmul.f32 %v890, 0.01
      %v895 = vsel %vm891, %v889, %v893
      %v896 = vsel %vm892, %v890, %v894
      %v897 = vld [vmem:[%s5] sm:$0xff]
      %v898 = vld [vmem:[%s5 + $0x8] sm:$0xff]
      %v899 = vld [vmem:[%s5 + $0x10] sm:$0xff]
      %v900 = vld [vmem:[%s5 + $0x18] sm:$0xff]
      %v901 = vld [vmem:[%s5 + $0x20] sm:$0xff]
      %v902 = vld [vmem:[%s5 + $0x28] sm:$0xff]
      %v903 = vld [vmem:[%s5 + $0x30] sm:$0xff]
      %v904 = vld [vmem:[%s5 + $0x38] sm:$0xff]
      %v905 = vld [vmem:[%s6] sm:$0x1]
      %v907 = vlaneseq
      %v908 = vshrl.u32 %v907, 7
      %v909 = vsub.s32 0, %v908
      %v910 = vrot.slane %v905, %v909
      %912 = vmatprep.subr.mxu0 0.0
      %913 = vmatpush1.msra.mxu0 %v897
      %914 = vmatprep.subr.mxu0 0.0
      %915 = vmatpush1.msra.mxu0 %v898
      %916 = vmatprep.subr.mxu0 0.0
      %917 = vmatpush1.msra.mxu0 %v899
      %918 = vmatprep.subr.mxu0 0.0
      %919 = vmatpush1.msra.mxu0 %v900
      %920 = vmatprep.subr.mxu0 0.0
      %921 = vmatpush1.msra.mxu0 %v901
      %922 = vmatprep.subr.mxu0 0.0
      %923 = vmatpush1.msra.mxu0 %v902
      %924 = vmatprep.subr.mxu0 0.0
      %925 = vmatpush1.msra.mxu0 %v903
      %926 = vmatprep.subr.mxu0 0.0
      %927 = vmatpush1.msra.mxu0 %v904
      %928 = vmatprep.subr.mxu0 0.0
      %929 = vmatpush1.msra.mxu0 0.0
      %930 = vmatprep.subr.mxu0 0.0
      %931 = vmatpush1.msra.mxu0 0.0
      %932 = vmatprep.subr.mxu0 0.0
      %933 = vmatpush1.msra.mxu0 0.0
      %934 = vmatprep.subr.mxu0 0.0
      %935 = vmatpush1.msra.mxu0 0.0
      %936 = vmatprep.subr.mxu0 0.0
      %937 = vmatpush1.msra.mxu0 0.0
      %938 = vmatprep.subr.mxu0 0.0
      %939 = vmatpush1.msra.mxu0 0.0
      %940 = vmatprep.subr.mxu0 0.0
      %941 = vmatpush1.msra.mxu0 0.0
      %942 = vmatprep.subr.mxu0 0.0
      %943 = vmatpush1.msra.mxu0 0.0
      %944 = vmatprep.subr.mxu0 0.0
      %945 = vmatpush1.msra.mxu0 0.0
      %946 = vmatprep.subr.mxu0 0.0
      %947 = vmatpush1.msra.mxu0 0.0
      %948 = vmatprep.subr.mxu0 0.0
      %949 = vmatpush1.msra.mxu0 0.0
      %950 = vmatprep.subr.mxu0 0.0
      %951 = vmatpush1.msra.mxu0 0.0
      %952 = vmatprep.subr.mxu0 0.0
      %953 = vmatpush1.msra.mxu0 0.0
      %954 = vmatprep.subr.mxu0 0.0
      %955 = vmatpush1.msra.mxu0 0.0
      %956 = vmatprep.subr.mxu0 0.0
      %957 = vmatpush1.msra.mxu0 0.0
      %958 = vmatprep.subr.mxu0 0.0
      %959 = vmatpush1.msra.mxu0 0.0
      %960 = vmatprep.subr.mxu0 0.0
      %961 = vmatpush1.msra.mxu0 0.0
      %962 = vmatprep.subr.mxu0 0.0
      %963 = vmatpush1.msra.mxu0 0.0
      %964 = vmatprep.subr.mxu0 0.0
      %965 = vmatpush1.msra.mxu0 0.0
      %966 = vmatprep.subr.mxu0 0.0
      %967 = vmatpush1.msra.mxu0 0.0
      %968 = vmatprep.subr.mxu0 0.0
      %969 = vmatpush1.msra.mxu0 0.0
      %970 = vmatprep.subr.mxu0 0.0
      %971 = vmatpush1.msra.mxu0 0.0
      %972 = vmatprep.subr.mxu0 0.0
      %973 = vmatpush1.msra.mxu0 0.0
      %974 = vmatprep.subr.mxu0 0.0
      %975 = vmatpush1.msra.mxu0 0.0
      %976 = vmatprep.mubr.f32.mxu0 0.0
      %977 = vmatmul.mubr.f32.gmra.mrb[0].mxu0 %v309
      %v978 = vpop.f32.mrb[0].mxu0
      %v979 = vadd.f32 %v910, %v978
      %v980 = vpop.f32.mrb[0].mxu0
      %981 = vmatprep.mubr.f32.mxu0 0.0
      %982 = vmatmul.mubr.f32.gmra.mrb[0].mxu0 %v311
      %v983 = vpop.f32.mrb[0].mxu0
      %v984 = vadd.f32 %v910, %v983
      %v985 = vpop.f32.mrb[0].mxu0
      %986 = vdwg.mxu0
      %v987 = vadd.f32 %v895, %v979
      %v988 = vadd.f32 %v896, %v984
      %989 = vst [vmem:[%s278] sm:$0xff] %v987
      %990 = vst [vmem:[%s278 + $0x8] sm:$0xff] %v988
      %p991 = scmp.lt.s32.totalorder %s18, 1
      %s992 = scalar_select %p991, %s18, 1
      %s993 = smul.addr %s992, 2
      %s994 = smul.addr %s993, 8
      %s995 = scalar_lea.vmem %s7, %s994
      // Predicated region
      $region49: #{residual_block.1} parent=47 // pred_check
        %p996 = pneg %p188
      $region50: #{residual_block.1} parent=47 // pred_check_branch
        %998 = sbr.rel (%p996) target = $region52
      $region51: #{residual_block.1} parent=47 // pred_region
        _
      $region52: #{residual_block.1} parent=47 // pred_fallthru
        _
    $region48: #{residual_block.1} parent=5 // pred_fallthru
      _
    %p999 = scmp.le.s32.totalorder 2, %s13
    // Predicated region
    $region53: #{residual_block.1} parent=5 // pred_check
      %p1000 = pneg %p999
    $region54: #{residual_block.1} parent=5 // pred_check_branch
      %1002 = sbr.rel (%p1000) target = $region56
    $region55: #{residual_block.1} parent=5 // pred_region
      %s1003 = ssub.s32 %s13, 2
      // Predicated region
      $region57: #{residual_block.1} parent=55 // pred_check
        %p1004 = pneg %p194
      $region58: #{residual_block.1} parent=55 // pred_check_branch
        %1006 = sbr.rel (%p1004) target = $region60
      $region59: #{residual_block.1} parent=55 // pred_region
        %p1007 = scmp.lt.s32.totalorder %s19, 1
        %s1008 = scalar_select %p1007, %s19, 1
        %s1009 = smul.addr %s1008, 2
        %s1010 = smul.addr %s1009, 8
        %s1011 = scalar_lea.vmem %s7, %s1010
      $region60: #{residual_block.1} parent=55 // pred_fallthru
        _
    $region56: #{residual_block.1} parent=5 // pred_fallthru
      _
  $region6: #{residual_block.1} parent=0 // loop_footer
    %s17 = sadd.s32 1, %s13
  $region7: #{residual_block.1} parent=0 // loop_footer_branch
    %12 = sbr.rel target = $region3
  $region8: #{residual_block.1} parent=0 // loop_exit
    _

</llo_original>
